<compile_context>
chip_gen: v5e
topology: v5e:2x2
jax: 0.10.0
libtpu: 0.0.40
codegen_flags: <defaults>
</compile_context>

<pallas_src>
import jax
import jax.numpy as jnp
from jax import lax
from jax.experimental import pallas as pl
from jax.experimental.pallas import tpu as pltpu
import numpy as np


# --------------------------------------------------------------------------
# Kernels
# --------------------------------------------------------------------------
def _highway_kernel(x_ref, w_ref, b_ref, out_ref):
    # x_ref:   (TB, H)    row tile of the flattened input
    # w_ref:   (H, 2H)    [Wn^T | Wt^T]  fused weights (f32 or bf16)
    # b_ref:   (1, 2H)    [bn   | bt ]   fused biases (f32)
    # out_ref: (TB, H)
    x = x_ref[...]
    H = x.shape[-1]
    w = w_ref[...]
    g = jnp.dot(x.astype(w.dtype), w,
                preferred_element_type=jnp.float32) + b_ref[...]
    h = jnp.maximum(g[:, :H], 0.0)          # relu(normal_layer(x))
    t = jax.nn.sigmoid(g[:, H:])            # sigmoid(transform_gate(x))
    xf = x.astype(jnp.float32)
    # torch.lerp(h, x, t) = h + t * (x - h)
    out_ref[...] = (h + t * (xf - h)).astype(out_ref.dtype)


def _highway_kernel_ktiled(xf_ref, xk_ref, w_ref, b_ref, out_ref, g_acc):
    # Grid = (row_tiles, k_tiles), k innermost ("arbitrary").
    # xf_ref: (TB, H)        full row tile of x (resident across k; for the lerp)
    # xk_ref: (TB, BK)       k-slice of x (matmul operand)
    # w_ref:  (BK, 2H)       k-slice of fused weights
    # b_ref:  (1, 2H)
    # g_acc:  (TB, 2H) f32   VMEM accumulator
    k = pl.program_id(1)

    @pl.when(k == 0)
    def _():
        g_acc[...] = jnp.zeros_like(g_acc)

    w = w_ref[...]
    g_acc[...] += jnp.dot(xk_ref[...].astype(w.dtype), w,
                          preferred_element_type=jnp.float32)

    @pl.when(k == pl.num_programs(1) - 1)
    def _():
        H = xf_ref.shape[-1]
        g = g_acc[...] + b_ref[...]
        h = jnp.maximum(g[:, :H], 0.0)
        t = jax.nn.sigmoid(g[:, H:])
        xf = xf_ref[...].astype(jnp.float32)
        out_ref[...] = (h + t * (xf - h)).astype(out_ref.dtype)


# --------------------------------------------------------------------------
# One-time parameter preprocessing (hoisted off the per-call critical path)
# --------------------------------------------------------------------------
def fuse_highway_params(params, weight_dtype=jnp.float32):
    """Fuse the two Linear layers: W=(H,2H)=[Wn^T|Wt^T], b=(1,2H)=[bn|bt]."""
    w = jnp.concatenate([params["wn"].T, params["wt"].T], axis=1).astype(weight_dtype)
    b = jnp.concatenate([params["bn"], params["bt"]]).astype(jnp.float32)[None, :]
    return w, b


# --------------------------------------------------------------------------
# Wrapper
# --------------------------------------------------------------------------
_VMEM_LIMIT_BYTES = 64 * 1024 * 1024          # <= physical VMEM on all of v5e/v6e/v7x
_RESIDENT_WEIGHT_BUDGET = 16 * 1024 * 1024    # beyond this, switch to K-tiling


def highway_fc(x, fused_w, fused_b, *, tile_rows=256, block_k=None):
    """x: (..., H); fused_w: (H, 2H); fused_b: (1, 2H)."""
    H = x.shape[-1]
    assert fused_w.shape == (H, 2 * H) and fused_b.shape == (1, 2 * H)
    # H need not be a multiple of 128 (full-dim blocks still lower), but a
    # lane-aligned H avoids masked stores / cross-lane relayouts at the h/t split.
    orig_shape = x.shape
    xr = x.reshape(-1, H)
    n = xr.shape[0]
    grid_rows = pl.cdiv(n, tile_rows)   # partial last block handled by Pallas masking

    # Auto-select the K-tiled path when the fused weight is too big to sit in VMEM.
    if block_k is None:
        weight_bytes = H * 2 * H * fused_w.dtype.itemsize
        if weight_bytes > _RESIDENT_WEIGHT_BUDGET:
            for cand in (512, 256, 128):
                if H % cand == 0:
                    block_k = cand
                    break

    cp = pltpu.CompilerParams
    if block_k is None or block_k >= H:
        # Resident-weight path: one MXU push per row tile, weights DMA'd once.
        out = pl.pallas_call(
            _highway_kernel,
            out_shape=jax.ShapeDtypeStruct((n, H), x.dtype),
            grid=(grid_rows,),
            in_specs=[
                pl.BlockSpec((tile_rows, H), lambda i: (i, 0)),
                pl.BlockSpec((H, 2 * H), lambda i: (0, 0)),
                pl.BlockSpec((1, 2 * H), lambda i: (0, 0)),
            ],
            out_specs=pl.BlockSpec((tile_rows, H), lambda i: (i, 0)),
            compiler_params=cp(dimension_semantics=("parallel",),
                               vmem_limit_bytes=_VMEM_LIMIT_BYTES),
        )(xr, fused_w, fused_b)
    else:
        assert H % block_k == 0, "block_k must divide H"
        k_tiles = H // block_k
        out = pl.pallas_call(
            _highway_kernel_ktiled,
            out_shape=jax.ShapeDtypeStruct((n, H), x.dtype),
            grid=(grid_rows, k_tiles),
            in_specs=[
                pl.BlockSpec((tile_rows, H), lambda i, k: (i, 0)),        # x full row
                pl.BlockSpec((tile_rows, block_k), lambda i, k: (i, k)),  # x k-slice
                pl.BlockSpec((block_k, 2 * H), lambda i, k: (k, 0)),      # W k-slice
                pl.BlockSpec((1, 2 * H), lambda i, k: (0, 0)),
            ],
            out_specs=pl.BlockSpec((tile_rows, H), lambda i, k: (i, 0)),
            scratch_shapes=[pltpu.VMEM((tile_rows, 2 * H), jnp.float32)],
            compiler_params=cp(dimension_semantics=("parallel", "arbitrary"),
                               vmem_limit_bytes=_VMEM_LIMIT_BYTES),
        )(xr, xr, fused_w, fused_b)

    return out.reshape(orig_shape)


# --------------------------------------------------------------------------
# Pure-JAX reference & init (mirrors the PyTorch module)
# --------------------------------------------------------------------------
def reference(x, params):
    hi = lax.Precision.HIGHEST
    h = jnp.maximum(jnp.dot(x, params["wn"].T, precision=hi) + params["bn"], 0.0)
    t = jax.nn.sigmoid(jnp.dot(x, params["wt"].T, precision=hi) + params["bt"])
    return h + t * (x - h)     # torch.lerp(h, x, t)


def init_params(key, H):
    # PyTorch nn.Linear init: U(-1/sqrt(in), 1/sqrt(in)); normal_layer.bias zeroed.
    ks = jax.random.split(key, 3)
    s = 1.0 / np.sqrt(H)
    u = lambda k, shape: jax.random.uniform(k, shape, jnp.float32, -s, s)
    return {
        "wn": u(ks[0], (H, H)),
        "bn": jnp.zeros((H,), jnp.float32),   # nn.init.zeros_(normal_layer.bias)
        "wt": u(ks[1], (H, H)),
        "bt": u(ks[2], (H,)),
    }


if __name__ == "__main__":
    key = jax.random.PRNGKey(0)
    kx, kp, kx2, kp2 = jax.random.split(key, 4)

    # Case 1: H=128 (lane aligned), batch=2, seq=37 (exercises ragged row tile),
    # f32 weights, resident-weight kernel.
    B, T, H = 2, 37, 128
    x = jax.random.normal(kx, (B, T, H), jnp.float32)
    params = init_params(kp, H)
    w32, b32 = fuse_highway_params(params)                       # one-time preprocessing
    out = jax.block_until_ready(highway_fc(x, w32, b32))
    np.testing.assert_allclose(np.asarray(out), np.asarray(reference(x, params)),
                               rtol=1e-4, atol=1e-4)

    # Case 2: bf16 fused weights (v6e/v7x MXU-native, halved weight traffic),
    # f32 accumulation, looser tolerance.
    w16, b16 = fuse_highway_params(params, weight_dtype=jnp.bfloat16)
    out16 = jax.block_until_ready(highway_fc(x, w16, b16))
    np.testing.assert_allclose(np.asarray(out16), np.asarray(reference(x, params)),
                               rtol=2e-2, atol=2e-2)

    # Case 3: K-tiled accumulator path (auto-selected for large H; forced here).
    H2 = 256
    x2 = jax.random.normal(kx2, (B, T, H2), jnp.float32)
    params2 = init_params(kp2, H2)
    w2, b2 = fuse_highway_params(params2)
    out2 = jax.block_until_ready(highway_fc(x2, w2, b2, block_k=128))
    np.testing.assert_allclose(np.asarray(out2), np.asarray(reference(x2, params2)),
                               rtol=1e-3, atol=1e-3)

    print("KERNEL_OK")
</pallas_src>

<mosaic_0001>
module attributes {stable_mosaic.version = 11 : i64} {
  func.func @_highway_kernel(%arg0: i32, %arg1: memref<256x128xf32, #tpu.memory_space<vmem>>, %arg2: memref<128x256xf32, #tpu.memory_space<vmem>>, %arg3: memref<1x256xf32, #tpu.memory_space<vmem>>, %arg4: memref<256x128xf32, #tpu.memory_space<vmem>>) attributes {dimension_semantics = [#tpu.dimension_semantics<parallel>], iteration_bounds = array<i64: 1>, scalar_prefetch = 0 : i64, scratch_operands = 0 : i64, tpu.core_type = #tpu.core_type<tc>, window_params = [{transform_indices = @transform_0, window_bounds = array<i64: 256, 128>}, {pipeline_mode = #tpu.pipeline_mode<synchronous>, transform_indices = @transform_1, window_bounds = array<i64: 128, 256>}, {pipeline_mode = #tpu.pipeline_mode<synchronous>, transform_indices = @transform_2, window_bounds = array<i64: 1, 256>}, {transform_indices = @transform_3, window_bounds = array<i64: 256, 128>}]} {
    %c0 = arith.constant 0 : index
    %c0_0 = arith.constant 0 : index
    %0 = vector.load %arg1[%c0, %c0_0] : memref<256x128xf32, #tpu.memory_space<vmem>>, vector<256x128xf32>
    %c0_1 = arith.constant 0 : index
    %c0_2 = arith.constant 0 : index
    %1 = vector.load %arg2[%c0_1, %c0_2] : memref<128x256xf32, #tpu.memory_space<vmem>>, vector<128x256xf32>
    %cst = arith.constant dense<0.000000e+00> : vector<256x256xf32>
    %2 = tpu.matmul %0, %1, %cst {dimension_numbers = #tpu.dot_dimension_numbers<[1], [0], [0], [1], [0, 0, 1, 1], [], []>} : vector<256x128xf32>, vector<128x256xf32>, vector<256x256xf32> -> vector<256x256xf32>
    %c0_3 = arith.constant 0 : index
    %c0_4 = arith.constant 0 : index
    %3 = vector.load %arg3[%c0_3, %c0_4] : memref<1x256xf32, #tpu.memory_space<vmem>>, vector<1x256xf32>
    %4 = vector.broadcast %3 : vector<1x256xf32> to vector<256x256xf32>
    %5 = arith.addf %2, %4 : vector<256x256xf32>
    %6 = vector.extract_strided_slice %5 {offsets = [0, 0], sizes = [256, 128], strides = [1, 1]} : vector<256x256xf32> to vector<256x128xf32>
    %cst_5 = arith.constant 0.000000e+00 : f32
    %7 = vector.broadcast %cst_5 : f32 to vector<256x128xf32>
    %8 = arith.maximumf %6, %7 : vector<256x128xf32>
    %9 = vector.extract_strided_slice %5 {offsets = [0, 128], sizes = [256, 128], strides = [1, 1]} : vector<256x256xf32> to vector<256x128xf32>
    %10 = arith.negf %9 : vector<256x128xf32>
    %11 = math.exp %10 : vector<256x128xf32>
    %cst_6 = arith.constant 1.000000e+00 : f32
    %12 = vector.broadcast %cst_6 : f32 to vector<256x128xf32>
    %13 = arith.addf %12, %11 : vector<256x128xf32>
    %14 = arith.divf %12, %13 : vector<256x128xf32>
    %15 = arith.subf %0, %8 : vector<256x128xf32>
    %16 = arith.mulf %14, %15 : vector<256x128xf32>
    %17 = arith.addf %8, %16 : vector<256x128xf32>
    %c0_7 = arith.constant 0 : index
    %c0_8 = arith.constant 0 : index
    %18 = vector.load %arg4[%c0_7, %c0_8] : memref<256x128xf32, #tpu.memory_space<vmem>>, vector<256x128xf32>
    tpu.vector_store %arg4[%c0_7, %c0_8], %17 {strides = array<i32>} : memref<256x128xf32, #tpu.memory_space<vmem>>, vector<256x128xf32>,
    return
  }
  func.func @transform_0(%arg0: i32) -> (i32, i32) {
    %c0_i32 = arith.constant 0 : i32
    %c0_i32_0 = arith.constant 0 : i32
    return %arg0, %c0_i32 : i32, i32
  }
  func.func @transform_1(%arg0: i32) -> (i32, i32) {
    %c0_i32 = arith.constant 0 : i32
    %c0_i32_0 = arith.constant 0 : i32
    %c0_i32_1 = arith.constant 0 : i32
    return %c0_i32, %c0_i32_0 : i32, i32
  }
  func.func @transform_2(%arg0: i32) -> (i32, i32) {
    %c0_i32 = arith.constant 0 : i32
    %c0_i32_0 = arith.constant 0 : i32
    %c0_i32_1 = arith.constant 0 : i32
    return %c0_i32, %c0_i32_0 : i32, i32
  }
  func.func @transform_3(%arg0: i32) -> (i32, i32) {
    %c0_i32 = arith.constant 0 : i32
    %c0_i32_0 = arith.constant 0 : i32
    return %arg0, %c0_i32 : i32, i32
  }
}

</mosaic_0001>

<llo_original>
// kernel: tpu_custom_call.1
$region0: #{tpu_custom_call.1}
  #allocation0 [shape = 'u32[]', space=smem, size = 0x4, offset = 0x4, fixed_abs, tag = 'smem constant byte address 0x4 - core index']
  #allocation1 [shape = 'u32[72,128]{1,0:T(1,128)}', space=vmem, size = 0x9000, scoped, tag = 'internal scratch']
  %s0 = inlined_call_operand.hbm [shape: f32[74,128], index: 0, kind: input, shape index: {}]
  %s1 = inlined_call_operand.hbm [shape: f32[128,256], index: 1, kind: input, shape index: {}]
  %s2 = inlined_call_operand.hbm [shape: f32[1,256], index: 2, kind: input, shape index: {}]
  %s3 = inlined_call_operand.hbm [shape: f32[74,128], index: 3, kind: output, shape index: {}]
  %s4 = sld [smem:[#allocation0]]
  $region34: #{tpu_custom_call.1} parent=0
    _
  %s6 = ssub.s32 1, %s4
  %s7 = scalar_select 0, %s6, %s4
  $region1: #{tpu_custom_call.1} parent=0
    #allocation2 [shape = 'u8[131072]{0}', space=vmem, size = 0x20000, scoped, tag = 'input window, operand 0, single buffered']
    #allocation3 [shape = 's32[1]{0}', space=sflag, size = 0x4, scoped, tag = 'scoped memory for tpu_custom_call.1']
    #allocation4 [shape = 's32[1]{0}', space=sflag, size = 0x4, scoped, tag = 'scoped memory for tpu_custom_call.1']
    #allocation5 [shape = 'u8[131072]{0}', space=vmem, size = 0x20000, scoped, tag = 'input window, operand 1, single buffered']
    #allocation6 [shape = 's32[1]{0}', space=sflag, size = 0x4, scoped, tag = 'scoped memory for tpu_custom_call.1']
    #allocation7 [shape = 'u8[1024]{0}', space=vmem, size = 0x400, scoped, tag = 'input window, operand 2, single buffered']
    #allocation8 [shape = 'u8[131072]{0}', space=vmem, size = 0x20000, scoped, tag = 'output window, operand 0, single buffered']
    %8 = vsyncpa [#allocation3], 0
    %9 = vsyncpa [#allocation6], 0
    %10 = vsyncpa [#allocation4], 0
    // Predicated region
    $region2: #{tpu_custom_call.1} parent=1 // pred_check
      _
    $region3: #{tpu_custom_call.1} parent=1 // pred_check_branch
      %12 = sbr.rel (0) target = $region5
    $region4: #{tpu_custom_call.1} parent=1 // pred_region
      %14 = vsyncadd [#allocation3], 2816
      %s15 = sshll.u32 %s0, 4
      %s16 = int_to_ptr.hbm [resolvable:$true] %s15
      %s17 = sshll.u32 [#allocation2], 4
      %s18 = int_to_ptr.vmem [resolvable:$true] %s17
      %23 = dma.hbm_to_vmem [thread:$0]  %s16, 1280, %s18, [#allocation3], 128, 128, 8
    $region5: #{tpu_custom_call.1} parent=1 // pred_fallthru
      _
    // Predicated region
    $region6: #{tpu_custom_call.1} parent=1 // pred_check
      _
    $region7: #{tpu_custom_call.1} parent=1 // pred_check_branch
      %25 = sbr.rel (0) target = $region9
    $region8: #{tpu_custom_call.1} parent=1 // pred_region
      %27 = vsyncadd [#allocation6], 0
      %s28 = sshll.u32 %s1, 4
      %s29 = int_to_ptr.hbm [resolvable:$true] %s28
      %s30 = sshll.u32 [#allocation5], 4
      %s31 = int_to_ptr.vmem [resolvable:$true] %s30
      %36 = dma.hbm_to_vmem [thread:$0]  %s29, 4096, %s31, [#allocation6], 256, 256, 16
    $region9: #{tpu_custom_call.1} parent=1 // pred_fallthru
      _
    // Predicated region
    $region10: #{tpu_custom_call.1} parent=1 // pred_check
      _
    $region11: #{tpu_custom_call.1} parent=1 // pred_check_branch
      %38 = sbr.rel (0) target = $region13
    $region12: #{tpu_custom_call.1} parent=1 // pred_region
      %40 = vsyncadd [#allocation6], 0
      %s42 = sshll.u32 %s2, 4
      %s43 = int_to_ptr.hbm [resolvable:$true] %s42
      %s44 = sshll.u32 [#allocation7], 4
      %s45 = int_to_ptr.vmem [resolvable:$true] %s44
      %47 = dma.hbm_to_vmem [thread:$0]  %s43, 32, %s45, [#allocation6]
    $region13: #{tpu_custom_call.1} parent=1 // pred_fallthru
      _
    // Predicated region
    $region14: #{tpu_custom_call.1} parent=1 // pred_check
      _
    $region15: #{tpu_custom_call.1} parent=1 // pred_check_branch
      %49 = sbr.rel (0) target = $region17
    $region16: #{tpu_custom_call.1} parent=1 // pred_region
      %51 = dma.done [#allocation3], 4096
    $region17: #{tpu_custom_call.1} parent=1 // pred_fallthru
      _
    // Predicated region
    $region18: #{tpu_custom_call.1} parent=1 // pred_check
      _
    $region19: #{tpu_custom_call.1} parent=1 // pred_check_branch
      %53 = sbr.rel (0) target = $region21
    $region20: #{tpu_custom_call.1} parent=1 // pred_region
      %55 = dma.done [#allocation6], 4096
    $region21: #{tpu_custom_call.1} parent=1 // pred_fallthru
      _
    // Predicated region
    $region22: #{tpu_custom_call.1} parent=1 // pred_check
      _
    $region23: #{tpu_custom_call.1} parent=1 // pred_check_branch
      %57 = sbr.rel (0) target = $region25
    $region24: #{tpu_custom_call.1} parent=1 // pred_region
      %59 = dma.done [#allocation6], 32
    $region25: #{tpu_custom_call.1} parent=1 // pred_fallthru
      _
    %v60 = vld [vmem:[#allocation2] sm:$0xff]
    %v61 = vld [vmem:[#allocation2 + $0x8] sm:$0xff]
    %v62 = vld [vmem:[#allocation2 + $0x10] sm:$0xff]
    %v63 = vld [vmem:[#allocation2 + $0x18] sm:$0xff]
    %v64 = vld [vmem:[#allocation2 + $0x20] sm:$0xff]
    %v65 = vld [vmem:[#allocation2 + $0x28] sm:$0xff]
    %v66 = vld [vmem:[#allocation2 + $0x30] sm:$0xff]
    %v67 = vld [vmem:[#allocation2 + $0x38] sm:$0xff]
    %v68 = vld [vmem:[#allocation2 + $0x40] sm:$0xff]
    %v69 = vld [vmem:[#allocation2 + $0x48] sm:$0xff]
    %v70 = vld [vmem:[#allocation2 + $0x50] sm:$0xff]
    %v71 = vld [vmem:[#allocation2 + $0x58] sm:$0xff]
    %v72 = vld [vmem:[#allocation2 + $0x60] sm:$0xff]
    %v73 = vld [vmem:[#allocation2 + $0x68] sm:$0xff]
    %v74 = vld [vmem:[#allocation2 + $0x70] sm:$0xff]
    %v75 = vld [vmem:[#allocation2 + $0x78] sm:$0xff]
    %v76 = vld [vmem:[#allocation2 + $0x80] sm:$0xff]
    %v77 = vld [vmem:[#allocation2 + $0x88] sm:$0xff]
    %v78 = vld [vmem:[#allocation2 + $0x90] sm:$0xff]
    %v79 = vld [vmem:[#allocation2 + $0x98] sm:$0xff]
    %v80 = vld [vmem:[#allocation2 + $0xa0] sm:$0xff]
    %v81 = vld [vmem:[#allocation2 + $0xa8] sm:$0xff]
    %v82 = vld [vmem:[#allocation2 + $0xb0] sm:$0xff]
    %v83 = vld [vmem:[#allocation2 + $0xb8] sm:$0xff]
    %v84 = vld [vmem:[#allocation2 + $0xc0] sm:$0xff]
    %v85 = vld [vmem:[#allocation2 + $0xc8] sm:$0xff]
    %v86 = vld [vmem:[#allocation2 + $0xd0] sm:$0xff]
    %v87 = vld [vmem:[#allocation2 + $0xd8] sm:$0xff]
    %v88 = vld [vmem:[#allocation2 + $0xe0] sm:$0xff]
    %v89 = vld [vmem:[#allocation2 + $0xe8] sm:$0xff]
    %v90 = vld [vmem:[#allocation2 + $0xf0] sm:$0xff]
    %v91 = vld [vmem:[#allocation2 + $0xf8] sm:$0xff]
    %v92 = vld [vmem:[#allocation5] sm:$0xff]
    %v93 = vld [vmem:[#allocation5 + $0x8] sm:$0xff]
    %v94 = vld [vmem:[#allocation5 + $0x10] sm:$0xff]
    %v95 = vld [vmem:[#allocation5 + $0x18] sm:$0xff]
    %v96 = vld [vmem:[#allocation5 + $0x20] sm:$0xff]
    %v97 = vld [vmem:[#allocation5 + $0x28] sm:$0xff]
    %v98 = vld [vmem:[#allocation5 + $0x30] sm:$0xff]
    %v99 = vld [vmem:[#allocation5 + $0x38] sm:$0xff]
    %v100 = vld [vmem:[#allocation5 + $0x40] sm:$0xff]
    %v101 = vld [vmem:[#allocation5 + $0x48] sm:$0xff]
    %v102 = vld [vmem:[#allocation5 + $0x50] sm:$0xff]
    %v103 = vld [vmem:[#allocation5 + $0x58] sm:$0xff]
    %v104 = vld [vmem:[#allocation5 + $0x60] sm:$0xff]
    %v105 = vld [vmem:[#allocation5 + $0x68] sm:$0xff]
    %v106 = vld [vmem:[#allocation5 + $0x70] sm:$0xff]
    %v107 = vld [vmem:[#allocation5 + $0x78] sm:$0xff]
    %v108 = vld [vmem:[#allocation5 + $0x80] sm:$0xff]
    %v109 = vld [vmem:[#allocation5 + $0x88] sm:$0xff]
    %v110 = vld [vmem:[#allocation5 + $0x90] sm:$0xff]
    %v111 = vld [vmem:[#allocation5 + $0x98] sm:$0xff]
    %v112 = vld [vmem:[#allocation5 + $0xa0] sm:$0xff]
    %v113 = vld [vmem:[#allocation5 + $0xa8] sm:$0xff]
    %v114 = vld [vmem:[#allocation5 + $0xb0] sm:$0xff]
    %v115 = vld [vmem:[#allocation5 + $0xb8] sm:$0xff]
    %v116 = vld [vmem:[#allocation5 + $0xc0] sm:$0xff]
    %v117 = vld [vmem:[#allocation5 + $0xc8] sm:$0xff]
    %v118 = vld [vmem:[#allocation5 + $0xd0] sm:$0xff]
    %v119 = vld [vmem:[#allocation5 + $0xd8] sm:$0xff]
    %v120 = vld [vmem:[#allocation5 + $0xe0] sm:$0xff]
    %v121 = vld [vmem:[#allocation5 + $0xe8] sm:$0xff]
    %v122 = vld [vmem:[#allocation5 + $0xf0] sm:$0xff]
    %v123 = vld [vmem:[#allocation5 + $0xf8] sm:$0xff]
    %v124 = vld [vmem:[#allocation7] sm:$0x3]
    %v126 = vperm.slane %v124, 0
    %v127 = vperm.slane %v124, 1
    %130 = vmatpush.msra.mxu0 %v122
    %131 = vmatpush.msra.mxu0 %v120
    %132 = vmatpush.msra.mxu0 %v118
    %133 = vmatpush.msra.mxu0 %v116
    %134 = vmatpush.msra.mxu0 %v114
    %135 = vmatpush.msra.mxu0 %v112
    %136 = vmatpush.msra.mxu0 %v110
    %137 = vmatpush.msra.mxu0 %v108
    %138 = vmatpush.msra.mxu0 %v106
    %139 = vmatpush.msra.mxu0 %v104
    %140 = vmatpush.msra.mxu0 %v102
    %141 = vmatpush.msra.mxu0 %v100
    %142 = vmatpush.msra.mxu0 %v98
    %143 = vmatpush.msra.mxu0 %v96
    %144 = vmatpush.msra.mxu0 %v94
    %145 = vmatpush.msra.mxu0 %v92
    %146 = vmatmul.f32.gmra.mxu0 %v60
    %v147 = vpop.f32.mrf.mxu0
    %v148 = vadd.f32 %v126, %v147
    %149 = vmatmul.f32.gmra.mxu0 %v61
    %v150 = vpop.f32.mrf.mxu0
    %v151 = vadd.f32 %v126, %v150
    %152 = vmatmul.f32.gmra.mxu0 %v62
    %v153 = vpop.f32.mrf.mxu0
    %v154 = vadd.f32 %v126, %v153
    %155 = vmatmul.f32.gmra.mxu0 %v63
    %v156 = vpop.f32.mrf.mxu0
    %v157 = vadd.f32 %v126, %v156
    %158 = vmatmul.f32.gmra.mxu0 %v64
    %v159 = vpop.f32.mrf.mxu0
    %v160 = vadd.f32 %v126, %v159
    %161 = vmatmul.f32.gmra.mxu0 %v65
    %v162 = vpop.f32.mrf.mxu0
    %v163 = vadd.f32 %v126, %v162
    %164 = vmatmul.f32.gmra.mxu0 %v66
    %v165 = vpop.f32.mrf.mxu0
    %v166 = vadd.f32 %v126, %v165
    %167 = vmatmul.f32.gmra.mxu0 %v67
    %v168 = vpop.f32.mrf.mxu0
    %v169 = vadd.f32 %v126, %v168
    %170 = vmatmul.f32.gmra.mxu0 %v68
    %v171 = vpop.f32.mrf.mxu0
    %v172 = vadd.f32 %v126, %v171
    %173 = vmatmul.f32.gmra.mxu0 %v69
    %v174 = vpop.f32.mrf.mxu0
    %v175 = vadd.f32 %v126, %v174
    %176 = vmatmul.f32.gmra.mxu0 %v70
    %v177 = vpop.f32.mrf.mxu0
    %v178 = vadd.f32 %v126, %v177
    %179 = vmatmul.f32.gmra.mxu0 %v71
    %v180 = vpop.f32.mrf.mxu0
    %v181 = vadd.f32 %v126, %v180
    %182 = vmatmul.f32.gmra.mxu0 %v72
    %v183 = vpop.f32.mrf.mxu0
    %v184 = vadd.f32 %v126, %v183
    %185 = vmatmul.f32.gmra.mxu0 %v73
    %v186 = vpop.f32.mrf.mxu0
    %v187 = vadd.f32 %v126, %v186
    %188 = vmatmul.f32.gmra.mxu0 %v74
    %v189 = vpop.f32.mrf.mxu0
    %v190 = vadd.f32 %v126, %v189
    %191 = vmatmul.f32.gmra.mxu0 %v75
    %v192 = vpop.f32.mrf.mxu0
    %v193 = vadd.f32 %v126, %v192
    %194 = vmatmul.f32.gmra.mxu0 %v76
    %v195 = vpop.f32.mrf.mxu0
    %v196 = vadd.f32 %v126, %v195
    %197 = vmatmul.f32.gmra.mxu0 %v77
    %v198 = vpop.f32.mrf.mxu0
    %v199 = vadd.f32 %v126, %v198
    %200 = vmatmul.f32.gmra.mxu0 %v78
    %v201 = vpop.f32.mrf.mxu0
    %v202 = vadd.f32 %v126, %v201
    %203 = vmatmul.f32.gmra.mxu0 %v79
    %v204 = vpop.f32.mrf.mxu0
    %v205 = vadd.f32 %v126, %v204
    %206 = vmatmul.f32.gmra.mxu0 %v80
    %v207 = vpop.f32.mrf.mxu0
    %v208 = vadd.f32 %v126, %v207
    %209 = vmatmul.f32.gmra.mxu0 %v81
    %v210 = vpop.f32.mrf.mxu0
    %v211 = vadd.f32 %v126, %v210
    %212 = vmatmul.f32.gmra.mxu0 %v82
    %v213 = vpop.f32.mrf.mxu0
    %v214 = vadd.f32 %v126, %v213
    %215 = vmatmul.f32.gmra.mxu0 %v83
    %v216 = vpop.f32.mrf.mxu0
    %v217 = vadd.f32 %v126, %v216
    %218 = vmatmul.f32.gmra.mxu0 %v84
    %v219 = vpop.f32.mrf.mxu0
    %v220 = vadd.f32 %v126, %v219
    %221 = vmatmul.f32.gmra.mxu0 %v85
    %v222 = vpop.f32.mrf.mxu0
    %v223 = vadd.f32 %v126, %v222
    %224 = vmatmul.f32.gmra.mxu0 %v86
    %v225 = vpop.f32.mrf.mxu0
    %v226 = vadd.f32 %v126, %v225
    %227 = vmatmul.f32.gmra.mxu0 %v87
    %v228 = vpop.f32.mrf.mxu0
    %v229 = vadd.f32 %v126, %v228
    %230 = vmatmul.f32.gmra.mxu0 %v88
    %v231 = vpop.f32.mrf.mxu0
    %v232 = vadd.f32 %v126, %v231
    %233 = vmatmul.f32.gmra.mxu0 %v89
    %v234 = vpop.f32.mrf.mxu0
    %v235 = vadd.f32 %v126, %v234
    %236 = vmatmul.f32.gmra.mxu0 %v90
    %v237 = vpop.f32.mrf.mxu0
    %v238 = vadd.f32 %v126, %v237
    %239 = vmatmul.f32.gmra.mxu0 %v91
    %v240 = vpop.f32.mrf.mxu0
    %v241 = vadd.f32 %v126, %v240
    %242 = vdwg.mxu0
    %243 = vmatpush.msra.mxu0 %v123
    %244 = vmatpush.msra.mxu0 %v121
    %245 = vmatpush.msra.mxu0 %v119
    %246 = vmatpush.msra.mxu0 %v117
    %247 = vmatpush.msra.mxu0 %v115
    %248 = vmatpush.msra.mxu0 %v113
    %249 = vmatpush.msra.mxu0 %v111
    %250 = vmatpush.msra.mxu0 %v109
    %251 = vmatpush.msra.mxu0 %v107
    %252 = vmatpush.msra.mxu0 %v105
    %253 = vmatpush.msra.mxu0 %v103
    %254 = vmatpush.msra.mxu0 %v101
    %255 = vmatpush.msra.mxu0 %v99
    %256 = vmatpush.msra.mxu0 %v97
    %257 = vmatpush.msra.mxu0 %v95
    %258 = vmatpush.msra.mxu0 %v93
    %259 = vmatmul.f32.gmra.mxu0 %v60
    %v260 = vpop.f32.mrf.mxu0
    %v261 = vadd.f32 %v127, %v260
    %262 = vmatmul.f32.gmra.mxu0 %v61
    %v263 = vpop.f32.mrf.mxu0
    %v264 = vadd.f32 %v127, %v263
    %265 = vmatmul.f32.gmra.mxu0 %v62
    %v266 = vpop.f32.mrf.mxu0
    %v267 = vadd.f32 %v127, %v266
    %268 = vmatmul.f32.gmra.mxu0 %v63
    %v269 = vpop.f32.mrf.mxu0
    %v270 = vadd.f32 %v127, %v269
    %271 = vmatmul.f32.gmra.mxu0 %v64
    %v272 = vpop.f32.mrf.mxu0
    %v273 = vadd.f32 %v127, %v272
    %274 = vmatmul.f32.gmra.mxu0 %v65
    %v275 = vpop.f32.mrf.mxu0
    %v276 = vadd.f32 %v127, %v275
    %277 = vmatmul.f32.gmra.mxu0 %v66
    %v278 = vpop.f32.mrf.mxu0
    %v279 = vadd.f32 %v127, %v278
    %280 = vmatmul.f32.gmra.mxu0 %v67
    %v281 = vpop.f32.mrf.mxu0
    %v282 = vadd.f32 %v127, %v281
    %283 = vmatmul.f32.gmra.mxu0 %v68
    %v284 = vpop.f32.mrf.mxu0
    %v285 = vadd.f32 %v127, %v284
    %286 = vmatmul.f32.gmra.mxu0 %v69
    %v287 = vpop.f32.mrf.mxu0
    %v288 = vadd.f32 %v127, %v287
    %289 = vmatmul.f32.gmra.mxu0 %v70
    %v290 = vpop.f32.mrf.mxu0
    %v291 = vadd.f32 %v127, %v290
    %292 = vmatmul.f32.gmra.mxu0 %v71
    %v293 = vpop.f32.mrf.mxu0
    %v294 = vadd.f32 %v127, %v293
    %295 = vmatmul.f32.gmra.mxu0 %v72
    %v296 = vpop.f32.mrf.mxu0
    %v297 = vadd.f32 %v127, %v296
    %298 = vmatmul.f32.gmra.mxu0 %v73
    %v299 = vpop.f32.mrf.mxu0
    %v300 = vadd.f32 %v127, %v299
    %301 = vmatmul.f32.gmra.mxu0 %v74
    %v302 = vpop.f32.mrf.mxu0
    %v303 = vadd.f32 %v127, %v302
    %304 = vmatmul.f32.gmra.mxu0 %v75
    %v305 = vpop.f32.mrf.mxu0
    %v306 = vadd.f32 %v127, %v305
    %307 = vmatmul.f32.gmra.mxu0 %v76
    %v308 = vpop.f32.mrf.mxu0
    %v309 = vadd.f32 %v127, %v308
    %310 = vmatmul.f32.gmra.mxu0 %v77
    %v311 = vpop.f32.mrf.mxu0
    %v312 = vadd.f32 %v127, %v311
    %313 = vmatmul.f32.gmra.mxu0 %v78
    %v314 = vpop.f32.mrf.mxu0
    %v315 = vadd.f32 %v127, %v314
    %316 = vmatmul.f32.gmra.mxu0 %v79
    %v317 = vpop.f32.mrf.mxu0
    %v318 = vadd.f32 %v127, %v317
    %319 = vmatmul.f32.gmra.mxu0 %v80
    %v320 = vpop.f32.mrf.mxu0
    %v321 = vadd.f32 %v127, %v320
    %322 = vmatmul.f32.gmra.mxu0 %v81
    %v323 = vpop.f32.mrf.mxu0
    %v324 = vadd.f32 %v127, %v323
    %325 = vmatmul.f32.gmra.mxu0 %v82
    %v326 = vpop.f32.mrf.mxu0
    %v327 = vadd.f32 %v127, %v326
    %328 = vmatmul.f32.gmra.mxu0 %v83
    %v329 = vpop.f32.mrf.mxu0
    %v330 = vadd.f32 %v127, %v329
    %331 = vmatmul.f32.gmra.mxu0 %v84
    %v332 = vpop.f32.mrf.mxu0
    %v333 = vadd.f32 %v127, %v332
    %334 = vmatmul.f32.gmra.mxu0 %v85
    %v335 = vpop.f32.mrf.mxu0
    %v336 = vadd.f32 %v127, %v335
    %337 = vmatmul.f32.gmra.mxu0 %v86
    %v338 = vpop.f32.mrf.mxu0
    %v339 = vadd.f32 %v127, %v338
    %340 = vmatmul.f32.gmra.mxu0 %v87
    %v341 = vpop.f32.mrf.mxu0
    %v342 = vadd.f32 %v127, %v341
    %343 = vmatmul.f32.gmra.mxu0 %v88
    %v344 = vpop.f32.mrf.mxu0
    %v345 = vadd.f32 %v127, %v344
    %346 = vmatmul.f32.gmra.mxu0 %v89
    %v347 = vpop.f32.mrf.mxu0
    %v348 = vadd.f32 %v127, %v347
    %349 = vmatmul.f32.gmra.mxu0 %v90
    %v350 = vpop.f32.mrf.mxu0
    %v351 = vadd.f32 %v127, %v350
    %352 = vmatmul.f32.gmra.mxu0 %v91
    %v353 = vpop.f32.mrf.mxu0
    %v354 = vadd.f32 %v127, %v353
    %355 = vdwg.mxu0
    %v356 = vmax.f32 %v148, 0.0
    %v357 = vmax.f32 %v151, 0.0
    %v358 = vmax.f32 %v154, 0.0
    %v359 = vmax.f32 %v157, 0.0
    %v360 = vmax.f32 %v160, 0.0
    %v361 = vmax.f32 %v163, 0.0
    %v362 = vmax.f32 %v166, 0.0
    %v363 = vmax.f32 %v169, 0.0
    %v364 = vmax.f32 %v172, 0.0
    %v365 = vmax.f32 %v175, 0.0
    %v366 = vmax.f32 %v178, 0.0
    %v367 = vmax.f32 %v181, 0.0
    %v368 = vmax.f32 %v184, 0.0
    %v369 = vmax.f32 %v187, 0.0
    %v370 = vmax.f32 %v190, 0.0
    %v371 = vmax.f32 %v193, 0.0
    %v372 = vmax.f32 %v196, 0.0
    %v373 = vmax.f32 %v199, 0.0
    %v374 = vmax.f32 %v202, 0.0
    %v375 = vmax.f32 %v205, 0.0
    %v376 = vmax.f32 %v208, 0.0
    %v377 = vmax.f32 %v211, 0.0
    %v378 = vmax.f32 %v214, 0.0
    %v379 = vmax.f32 %v217, 0.0
    %v380 = vmax.f32 %v220, 0.0
    %v381 = vmax.f32 %v223, 0.0
    %v382 = vmax.f32 %v226, 0.0
    %v383 = vmax.f32 %v229, 0.0
    %v384 = vmax.f32 %v232, 0.0
    %v385 = vmax.f32 %v235, 0.0
    %v386 = vmax.f32 %v238, 0.0
    %v387 = vmax.f32 %v241, 0.0
    %v388 = vxor.u32 %v261, 2147483648
    %v389 = vxor.u32 %v264, 2147483648
    %v390 = vxor.u32 %v267, 2147483648
    %v391 = vxor.u32 %v270, 2147483648
    %v392 = vxor.u32 %v273, 2147483648
    %v393 = vxor.u32 %v276, 2147483648
    %v394 = vxor.u32 %v279, 2147483648
    %v395 = vxor.u32 %v282, 2147483648
    %v396 = vxor.u32 %v285, 2147483648
    %v397 = vxor.u32 %v288, 2147483648
    %v398 = vxor.u32 %v291, 2147483648
    %v399 = vxor.u32 %v294, 2147483648
    %v400 = vxor.u32 %v297, 2147483648
    %v401 = vxor.u32 %v300, 2147483648
    %v402 = vxor.u32 %v303, 2147483648
    %v403 = vxor.u32 %v306, 2147483648
    %v404 = vxor.u32 %v309, 2147483648
    %v405 = vxor.u32 %v312, 2147483648
    %v406 = vxor.u32 %v315, 2147483648
    %v407 = vxor.u32 %v318, 2147483648
    %v408 = vxor.u32 %v321, 2147483648
    %v409 = vxor.u32 %v324, 2147483648
    %v410 = vxor.u32 %v327, 2147483648
    %v411 = vxor.u32 %v330, 2147483648
    %v412 = vxor.u32 %v333, 2147483648
    %v413 = vxor.u32 %v336, 2147483648
    %v414 = vxor.u32 %v339, 2147483648
    %v415 = vxor.u32 %v342, 2147483648
    %v416 = vxor.u32 %v345, 2147483648
    %v417 = vxor.u32 %v348, 2147483648
    %v418 = vxor.u32 %v351, 2147483648
    %v419 = vxor.u32 %v354, 2147483648
    %v420 = vmul.f32 %v388, 1.442695
    %v421 = vpow.pop %v420
    %v422 = vmul.f32 %v389, 1.442695
    %v423 = vpow.pop %v422
    %v424 = vmul.f32 %v390, 1.442695
    %v425 = vpow.pop %v424
    %v426 = vmul.f32 %v391, 1.442695
    %v427 = vpow.pop %v426
    %v428 = vmul.f32 %v392, 1.442695
    %v429 = vpow.pop %v428
    %v430 = vmul.f32 %v393, 1.442695
    %v431 = vpow.pop %v430
    %v432 = vmul.f32 %v394, 1.442695
    %v433 = vpow.pop %v432
    %v434 = vmul.f32 %v395, 1.442695
    %v435 = vpow.pop %v434
    %v436 = vmul.f32 %v396, 1.442695
    %v437 = vpow.pop %v436
    %v438 = vmul.f32 %v397, 1.442695
    %v439 = vpow.pop %v438
    %v440 = vmul.f32 %v398, 1.442695
    %v441 = vpow.pop %v440
    %v442 = vmul.f32 %v399, 1.442695
    %v443 = vpow.pop %v442
    %v444 = vmul.f32 %v400, 1.442695
    %v445 = vpow.pop %v444
    %v446 = vmul.f32 %v401, 1.442695
    %v447 = vpow.pop %v446
    %v448 = vmul.f32 %v402, 1.442695
    %v449 = vpow.pop %v448
    %v450 = vmul.f32 %v403, 1.442695
    %v451 = vpow.pop %v450
    %v452 = vmul.f32 %v404, 1.442695
    %v453 = vpow.pop %v452
    %v454 = vmul.f32 %v405, 1.442695
    %v455 = vpow.pop %v454
    %v456 = vmul.f32 %v406, 1.442695
    %v457 = vpow.pop %v456
    %v458 = vmul.f32 %v407, 1.442695
    %v459 = vpow.pop %v458
    %v460 = vmul.f32 %v408, 1.442695
    %v461 = vpow.pop %v460
    %v462 = vmul.f32 %v409, 1.442695
    %v463 = vpow.pop %v462
    %v464 = vmul.f32 %v410, 1.442695
    %v465 = vpow.pop %v464
    %v466 = vmul.f32 %v411, 1.442695
    %v467 = vpow.pop %v466
    %v468 = vmul.f32 %v412, 1.442695
    %v469 = vpow.pop %v468
    %v470 = vmul.f32 %v413, 1.442695
    %v471 = vpow.pop %v470
    %v472 = vmul.f32 %v414, 1.442695
    %v473 = vpow.pop %v472
    %v474 = vmul.f32 %v415, 1.442695
    %v475 = vpow.pop %v474
    %v476 = vmul.f32 %v416, 1.442695
    %v477 = vpow.pop %v476
    %v478 = vmul.f32 %v417, 1.442695
    %v479 = vpow.pop %v478
    %v480 = vmul.f32 %v418, 1.442695
    %v481 = vpow.pop %v480
    %v482 = vmul.f32 %v419, 1.442695
    %v483 = vpow.pop %v482
    %v484 = vadd.f32 %v421, 1.0
    %v485 = vadd.f32 %v423, 1.0
    %v486 = vadd.f32 %v425, 1.0
    %v487 = vadd.f32 %v427, 1.0
    %v488 = vadd.f32 %v429, 1.0
    %v489 = vadd.f32 %v431, 1.0
    %v490 = vadd.f32 %v433, 1.0
    %v491 = vadd.f32 %v435, 1.0
    %v492 = vadd.f32 %v437, 1.0
    %v493 = vadd.f32 %v439, 1.0
    %v494 = vadd.f32 %v441, 1.0
    %v495 = vadd.f32 %v443, 1.0
    %v496 = vadd.f32 %v445, 1.0
    %v497 = vadd.f32 %v447, 1.0
    %v498 = vadd.f32 %v449, 1.0
    %v499 = vadd.f32 %v451, 1.0
    %v500 = vadd.f32 %v453, 1.0
    %v501 = vadd.f32 %v455, 1.0
    %v502 = vadd.f32 %v457, 1.0
    %v503 = vadd.f32 %v459, 1.0
    %v504 = vadd.f32 %v461, 1.0
    %v505 = vadd.f32 %v463, 1.0
    %v506 = vadd.f32 %v465, 1.0
    %v507 = vadd.f32 %v467, 1.0
    %v508 = vadd.f32 %v469, 1.0
    %v509 = vadd.f32 %v471, 1.0
    %v510 = vadd.f32 %v473, 1.0
    %v511 = vadd.f32 %v475, 1.0
    %v512 = vadd.f32 %v477, 1.0
    %v513 = vadd.f32 %v479, 1.0
    %v514 = vadd.f32 %v481, 1.0
    %v515 = vadd.f32 %v483, 1.0
    %v516 = vrcp.pop %v484
    %v517 = vmul.f32 %v484, %v516
    %v518 = vsub.f32 1.0, %v517
    %v519 = vmul.f32 %v516, %v518
    %v520 = vadd.f32 %v516, %v519
    %vm521 = vweird.f32 %v484
    %vm522 = vweird.f32 %v516
    %vm523 = vmor %vm521, %vm522
    %v524 = vsel %vm523, %v516, %v520
    %v525 = vand.u32 2147483647, %v484
    %vm526 = vcmp.eq.f32.partialorder %v525, 8.507059e+37
    %v527 = vand.u32 %v484, 2147483648
    %v528 = vor.u32 1.1754944e-38, %v527
    %v529 = vsel %vm526, %v528, %v524
    %v530 = vmul.f32 1.0, %v529
    %v531 = vrcp.pop %v485
    %v532 = vmul.f32 %v485, %v531
    %v533 = vsub.f32 1.0, %v532
    %v534 = vmul.f32 %v531, %v533
    %v535 = vadd.f32 %v531, %v534
    %vm536 = vweird.f32 %v485
    %vm537 = vweird.f32 %v531
    %vm538 = vmor %vm536, %vm537
    %v539 = vsel %vm538, %v531, %v535
    %v540 = vand.u32 2147483647, %v485
    %vm541 = vcmp.eq.f32.partialorder %v540, 8.507059e+37
    %v542 = vand.u32 %v485, 2147483648
    %v543 = vor.u32 1.1754944e-38, %v542
    %v544 = vsel %vm541, %v543, %v539
    %v545 = vmul.f32 1.0, %v544
    %v546 = vrcp.pop %v486
    %v547 = vmul.f32 %v486, %v546
    %v548 = vsub.f32 1.0, %v547
    %v549 = vmul.f32 %v546, %v548
    %v550 = vadd.f32 %v546, %v549
    %vm551 = vweird.f32 %v486
    %vm552 = vweird.f32 %v546
    %vm553 = vmor %vm551, %vm552
    %v554 = vsel %vm553, %v546, %v550
    %v555 = vand.u32 2147483647, %v486
    %vm556 = vcmp.eq.f32.partialorder %v555, 8.507059e+37
    %v557 = vand.u32 %v486, 2147483648
    %v558 = vor.u32 1.1754944e-38, %v557
    %v559 = vsel %vm556, %v558, %v554
    %v560 = vmul.f32 1.0, %v559
    %v561 = vrcp.pop %v487
    %v562 = vmul.f32 %v487, %v561
    %v563 = vsub.f32 1.0, %v562
    %v564 = vmul.f32 %v561, %v563
    %v565 = vadd.f32 %v561, %v564
    %vm566 = vweird.f32 %v487
    %vm567 = vweird.f32 %v561
    %vm568 = vmor %vm566, %vm567
    %v569 = vsel %vm568, %v561, %v565
    %v570 = vand.u32 2147483647, %v487
    %vm571 = vcmp.eq.f32.partialorder %v570, 8.507059e+37
    %v572 = vand.u32 %v487, 2147483648
    %v573 = vor.u32 1.1754944e-38, %v572
    %v574 = vsel %vm571, %v573, %v569
    %v575 = vmul.f32 1.0, %v574
    %v576 = vrcp.pop %v488
    %v577 = vmul.f32 %v488, %v576
    %v578 = vsub.f32 1.0, %v577
    %v579 = vmul.f32 %v576, %v578
    %v580 = vadd.f32 %v576, %v579
    %vm581 = vweird.f32 %v488
    %vm582 = vweird.f32 %v576
    %vm583 = vmor %vm581, %vm582
    %v584 = vsel %vm583, %v576, %v580
    %v585 = vand.u32 2147483647, %v488
    %vm586 = vcmp.eq.f32.partialorder %v585, 8.507059e+37
    %v587 = vand.u32 %v488, 2147483648
    %v588 = vor.u32 1.1754944e-38, %v587
    %v589 = vsel %vm586, %v588, %v584
    %v590 = vmul.f32 1.0, %v589
    %v591 = vrcp.pop %v489
    %v592 = vmul.f32 %v489, %v591
    %v593 = vsub.f32 1.0, %v592
    %v594 = vmul.f32 %v591, %v593
    %v595 = vadd.f32 %v591, %v594
    %vm596 = vweird.f32 %v489
    %vm597 = vweird.f32 %v591
    %vm598 = vmor %vm596, %vm597
    %v599 = vsel %vm598, %v591, %v595
    %v600 = vand.u32 2147483647, %v489
    %vm601 = vcmp.eq.f32.partialorder %v600, 8.507059e+37
    %v602 = vand.u32 %v489, 2147483648
    %v603 = vor.u32 1.1754944e-38, %v602
    %v604 = vsel %vm601, %v603, %v599
    %v605 = vmul.f32 1.0, %v604
    %v606 = vrcp.pop %v490
    %v607 = vmul.f32 %v490, %v606
    %v608 = vsub.f32 1.0, %v607
    %v609 = vmul.f32 %v606, %v608
    %v610 = vadd.f32 %v606, %v609
    %vm611 = vweird.f32 %v490
    %vm612 = vweird.f32 %v606
    %vm613 = vmor %vm611, %vm612
    %v614 = vsel %vm613, %v606, %v610
    %v615 = vand.u32 2147483647, %v490
    %vm616 = vcmp.eq.f32.partialorder %v615, 8.507059e+37
    %v617 = vand.u32 %v490, 2147483648
    %v618 = vor.u32 1.1754944e-38, %v617
    %v619 = vsel %vm616, %v618, %v614
    %v620 = vmul.f32 1.0, %v619
    %v621 = vrcp.pop %v491
    %v622 = vmul.f32 %v491, %v621
    %v623 = vsub.f32 1.0, %v622
    %v624 = vmul.f32 %v621, %v623
    %v625 = vadd.f32 %v621, %v624
    %vm626 = vweird.f32 %v491
    %vm627 = vweird.f32 %v621
    %vm628 = vmor %vm626, %vm627
    %v629 = vsel %vm628, %v621, %v625
    %v630 = vand.u32 2147483647, %v491
    %vm631 = vcmp.eq.f32.partialorder %v630, 8.507059e+37
    %v632 = vand.u32 %v491, 2147483648
    %v633 = vor.u32 1.1754944e-38, %v632
    %v634 = vsel %vm631, %v633, %v629
    %v635 = vmul.f32 1.0, %v634
    %v636 = vrcp.pop %v492
    %v637 = vmul.f32 %v492, %v636
    %v638 = vsub.f32 1.0, %v637
    %v639 = vmul.f32 %v636, %v638
    %v640 = vadd.f32 %v636, %v639
    %vm641 = vweird.f32 %v492
    %vm642 = vweird.f32 %v636
    %vm643 = vmor %vm641, %vm642
    %v644 = vsel %vm643, %v636, %v640
    %v645 = vand.u32 2147483647, %v492
    %vm646 = vcmp.eq.f32.partialorder %v645, 8.507059e+37
    %v647 = vand.u32 %v492, 2147483648
    %v648 = vor.u32 1.1754944e-38, %v647
    %v649 = vsel %vm646, %v648, %v644
    %v650 = vmul.f32 1.0, %v649
    %v651 = vrcp.pop %v493
    %v652 = vmul.f32 %v493, %v651
    %v653 = vsub.f32 1.0, %v652
    %v654 = vmul.f32 %v651, %v653
    %v655 = vadd.f32 %v651, %v654
    %vm656 = vweird.f32 %v493
    %vm657 = vweird.f32 %v651
    %vm658 = vmor %vm656, %vm657
    %v659 = vsel %vm658, %v651, %v655
    %v660 = vand.u32 2147483647, %v493
    %vm661 = vcmp.eq.f32.partialorder %v660, 8.507059e+37
    %v662 = vand.u32 %v493, 2147483648
    %v663 = vor.u32 1.1754944e-38, %v662
    %v664 = vsel %vm661, %v663, %v659
    %v665 = vmul.f32 1.0, %v664
    %v666 = vrcp.pop %v494
    %v667 = vmul.f32 %v494, %v666
    %v668 = vsub.f32 1.0, %v667
    %v669 = vmul.f32 %v666, %v668
    %v670 = vadd.f32 %v666, %v669
    %vm671 = vweird.f32 %v494
    %vm672 = vweird.f32 %v666
    %vm673 = vmor %vm671, %vm672
    %v674 = vsel %vm673, %v666, %v670
    %v675 = vand.u32 2147483647, %v494
    %vm676 = vcmp.eq.f32.partialorder %v675, 8.507059e+37
    %v677 = vand.u32 %v494, 2147483648
    %v678 = vor.u32 1.1754944e-38, %v677
    %v679 = vsel %vm676, %v678, %v674
    %v680 = vmul.f32 1.0, %v679
    %v681 = vrcp.pop %v495
    %v682 = vmul.f32 %v495, %v681
    %v683 = vsub.f32 1.0, %v682
    %v684 = vmul.f32 %v681, %v683
    %v685 = vadd.f32 %v681, %v684
    %vm686 = vweird.f32 %v495
    %vm687 = vweird.f32 %v681
    %vm688 = vmor %vm686, %vm687
    %v689 = vsel %vm688, %v681, %v685
    %v690 = vand.u32 2147483647, %v495
    %vm691 = vcmp.eq.f32.partialorder %v690, 8.507059e+37
    %v692 = vand.u32 %v495, 2147483648
    %v693 = vor.u32 1.1754944e-38, %v692
    %v694 = vsel %vm691, %v693, %v689
    %v695 = vmul.f32 1.0, %v694
    %v696 = vrcp.pop %v496
    %v697 = vmul.f32 %v496, %v696
    %v698 = vsub.f32 1.0, %v697
    %v699 = vmul.f32 %v696, %v698
    %v700 = vadd.f32 %v696, %v699
    %vm701 = vweird.f32 %v496
    %vm702 = vweird.f32 %v696
    %vm703 = vmor %vm701, %vm702
    %v704 = vsel %vm703, %v696, %v700
    %v705 = vand.u32 2147483647, %v496
    %vm706 = vcmp.eq.f32.partialorder %v705, 8.507059e+37
    %v707 = vand.u32 %v496, 2147483648
    %v708 = vor.u32 1.1754944e-38, %v707
    %v709 = vsel %vm706, %v708, %v704
    %v710 = vmul.f32 1.0, %v709
    %v711 = vrcp.pop %v497
    %v712 = vmul.f32 %v497, %v711
    %v713 = vsub.f32 1.0, %v712
    %v714 = vmul.f32 %v711, %v713
    %v715 = vadd.f32 %v711, %v714
    %vm716 = vweird.f32 %v497
    %vm717 = vweird.f32 %v711
    %vm718 = vmor %vm716, %vm717
    %v719 = vsel %vm718, %v711, %v715
    %v720 = vand.u32 2147483647, %v497
    %vm721 = vcmp.eq.f32.partialorder %v720, 8.507059e+37
    %v722 = vand.u32 %v497, 2147483648
    %v723 = vor.u32 1.1754944e-38, %v722
    %v724 = vsel %vm721, %v723, %v719
    %v725 = vmul.f32 1.0, %v724
    %v726 = vrcp.pop %v498
    %v727 = vmul.f32 %v498, %v726
    %v728 = vsub.f32 1.0, %v727
    %v729 = vmul.f32 %v726, %v728
    %v730 = vadd.f32 %v726, %v729
    %vm731 = vweird.f32 %v498
    %vm732 = vweird.f32 %v726
    %vm733 = vmor %vm731, %vm732
    %v734 = vsel %vm733, %v726, %v730
    %v735 = vand.u32 2147483647, %v498
    %vm736 = vcmp.eq.f32.partialorder %v735, 8.507059e+37
    %v737 = vand.u32 %v498, 2147483648
    %v738 = vor.u32 1.1754944e-38, %v737
    %v739 = vsel %vm736, %v738, %v734
    %v740 = vmul.f32 1.0, %v739
    %v741 = vrcp.pop %v499
    %v742 = vmul.f32 %v499, %v741
    %v743 = vsub.f32 1.0, %v742
    %v744 = vmul.f32 %v741, %v743
    %v745 = vadd.f32 %v741, %v744
    %vm746 = vweird.f32 %v499
    %vm747 = vweird.f32 %v741
    %vm748 = vmor %vm746, %vm747
    %v749 = vsel %vm748, %v741, %v745
    %v750 = vand.u32 2147483647, %v499
    %vm751 = vcmp.eq.f32.partialorder %v750, 8.507059e+37
    %v752 = vand.u32 %v499, 2147483648
    %v753 = vor.u32 1.1754944e-38, %v752
    %v754 = vsel %vm751, %v753, %v749
    %v755 = vmul.f32 1.0, %v754
    %v756 = vrcp.pop %v500
    %v757 = vmul.f32 %v500, %v756
    %v758 = vsub.f32 1.0, %v757
    %v759 = vmul.f32 %v756, %v758
    %v760 = vadd.f32 %v756, %v759
    %vm761 = vweird.f32 %v500
    %vm762 = vweird.f32 %v756
    %vm763 = vmor %vm761, %vm762
    %v764 = vsel %vm763, %v756, %v760
    %v765 = vand.u32 2147483647, %v500
    %vm766 = vcmp.eq.f32.partialorder %v765, 8.507059e+37
    %v767 = vand.u32 %v500, 2147483648
    %v768 = vor.u32 1.1754944e-38, %v767
    %v769 = vsel %vm766, %v768, %v764
    %v770 = vmul.f32 1.0, %v769
    %v771 = vrcp.pop %v501
    %v772 = vmul.f32 %v501, %v771
    %v773 = vsub.f32 1.0, %v772
    %v774 = vmul.f32 %v771, %v773
    %v775 = vadd.f32 %v771, %v774
    %vm776 = vweird.f32 %v501
    %vm777 = vweird.f32 %v771
    %vm778 = vmor %vm776, %vm777
    %v779 = vsel %vm778, %v771, %v775
    %v780 = vand.u32 2147483647, %v501
    %vm781 = vcmp.eq.f32.partialorder %v780, 8.507059e+37
    %v782 = vand.u32 %v501, 2147483648
    %v783 = vor.u32 1.1754944e-38, %v782
    %v784 = vsel %vm781, %v783, %v779
    %v785 = vmul.f32 1.0, %v784
    %v786 = vrcp.pop %v502
    %v787 = vmul.f32 %v502, %v786
    %v788 = vsub.f32 1.0, %v787
    %v789 = vmul.f32 %v786, %v788
    %v790 = vadd.f32 %v786, %v789
    %vm791 = vweird.f32 %v502
    %vm792 = vweird.f32 %v786
    %vm793 = vmor %vm791, %vm792
    %v794 = vsel %vm793, %v786, %v790
    %v795 = vand.u32 2147483647, %v502
    %vm796 = vcmp.eq.f32.partialorder %v795, 8.507059e+37
    %v797 = vand.u32 %v502, 2147483648
    %v798 = vor.u32 1.1754944e-38, %v797
    %v799 = vsel %vm796, %v798, %v794
    %v800 = vmul.f32 1.0, %v799
    %v801 = vrcp.pop %v503
    %v802 = vmul.f32 %v503, %v801
    %v803 = vsub.f32 1.0, %v802
    %v804 = vmul.f32 %v801, %v803
    %v805 = vadd.f32 %v801, %v804
    %vm806 = vweird.f32 %v503
    %vm807 = vweird.f32 %v801
    %vm808 = vmor %vm806, %vm807
    %v809 = vsel %vm808, %v801, %v805
    %v810 = vand.u32 2147483647, %v503
    %vm811 = vcmp.eq.f32.partialorder %v810, 8.507059e+37
    %v812 = vand.u32 %v503, 2147483648
    %v813 = vor.u32 1.1754944e-38, %v812
    %v814 = vsel %vm811, %v813, %v809
    %v815 = vmul.f32 1.0, %v814
    %v816 = vrcp.pop %v504
    %v817 = vmul.f32 %v504, %v816
    %v818 = vsub.f32 1.0, %v817
    %v819 = vmul.f32 %v816, %v818
    %v820 = vadd.f32 %v816, %v819
    %vm821 = vweird.f32 %v504
    %vm822 = vweird.f32 %v816
    %vm823 = vmor %vm821, %vm822
    %v824 = vsel %vm823, %v816, %v820
    %v825 = vand.u32 2147483647, %v504
    %vm826 = vcmp.eq.f32.partialorder %v825, 8.507059e+37
    %v827 = vand.u32 %v504, 2147483648
    %v828 = vor.u32 1.1754944e-38, %v827
    %v829 = vsel %vm826, %v828, %v824
    %v830 = vmul.f32 1.0, %v829
    %v831 = vrcp.pop %v505
    %v832 = vmul.f32 %v505, %v831
    %v833 = vsub.f32 1.0, %v832
    %v834 = vmul.f32 %v831, %v833
    %v835 = vadd.f32 %v831, %v834
    %vm836 = vweird.f32 %v505
    %vm837 = vweird.f32 %v831
    %vm838 = vmor %vm836, %vm837
    %v839 = vsel %vm838, %v831, %v835
    %v840 = vand.u32 2147483647, %v505
    %vm841 = vcmp.eq.f32.partialorder %v840, 8.507059e+37
    %v842 = vand.u32 %v505, 2147483648
    %v843 = vor.u32 1.1754944e-38, %v842
    %v844 = vsel %vm841, %v843, %v839
    %v845 = vmul.f32 1.0, %v844
    %v846 = vrcp.pop %v506
    %v847 = vmul.f32 %v506, %v846
    %v848 = vsub.f32 1.0, %v847
    %v849 = vmul.f32 %v846, %v848
    %v850 = vadd.f32 %v846, %v849
    %vm851 = vweird.f32 %v506
    %vm852 = vweird.f32 %v846
    %vm853 = vmor %vm851, %vm852
    %v854 = vsel %vm853, %v846, %v850
    %v855 = vand.u32 2147483647, %v506
    %vm856 = vcmp.eq.f32.partialorder %v855, 8.507059e+37
    %v857 = vand.u32 %v506, 2147483648
    %v858 = vor.u32 1.1754944e-38, %v857
    %v859 = vsel %vm856, %v858, %v854
    %v860 = vmul.f32 1.0, %v859
    %v861 = vrcp.pop %v507
    %v862 = vmul.f32 %v507, %v861
    %v863 = vsub.f32 1.0, %v862
    %v864 = vmul.f32 %v861, %v863
    %v865 = vadd.f32 %v861, %v864
    %vm866 = vweird.f32 %v507
    %vm867 = vweird.f32 %v861
    %vm868 = vmor %vm866, %vm867
    %v869 = vsel %vm868, %v861, %v865
    %v870 = vand.u32 2147483647, %v507
    %vm871 = vcmp.eq.f32.partialorder %v870, 8.507059e+37
    %v872 = vand.u32 %v507, 2147483648
    %v873 = vor.u32 1.1754944e-38, %v872
    %v874 = vsel %vm871, %v873, %v869
    %v875 = vmul.f32 1.0, %v874
    %v876 = vrcp.pop %v508
    %v877 = vmul.f32 %v508, %v876
    %v878 = vsub.f32 1.0, %v877
    %v879 = vmul.f32 %v876, %v878
    %v880 = vadd.f32 %v876, %v879
    %vm881 = vweird.f32 %v508
    %vm882 = vweird.f32 %v876
    %vm883 = vmor %vm881, %vm882
    %v884 = vsel %vm883, %v876, %v880
    %v885 = vand.u32 2147483647, %v508
    %vm886 = vcmp.eq.f32.partialorder %v885, 8.507059e+37
    %v887 = vand.u32 %v508, 2147483648
    %v888 = vor.u32 1.1754944e-38, %v887
    %v889 = vsel %vm886, %v888, %v884
    %v890 = vmul.f32 1.0, %v889
    %v891 = vrcp.pop %v509
    %v892 = vmul.f32 %v509, %v891
    %v893 = vsub.f32 1.0, %v892
    %v894 = vmul.f32 %v891, %v893
    %v895 = vadd.f32 %v891, %v894
    %vm896 = vweird.f32 %v509
    %vm897 = vweird.f32 %v891
    %vm898 = vmor %vm896, %vm897
    %v899 = vsel %vm898, %v891, %v895
    %v900 = vand.u32 2147483647, %v509
    %vm901 = vcmp.eq.f32.partialorder %v900, 8.507059e+37
    %v902 = vand.u32 %v509, 2147483648
    %v903 = vor.u32 1.1754944e-38, %v902
    %v904 = vsel %vm901, %v903, %v899
    %v905 = vmul.f32 1.0, %v904
    %v906 = vrcp.pop %v510
    %v907 = vmul.f32 %v510, %v906
    %v908 = vsub.f32 1.0, %v907
    %v909 = vmul.f32 %v906, %v908
    %v910 = vadd.f32 %v906, %v909
    %vm911 = vweird.f32 %v510
    %vm912 = vweird.f32 %v906
    %vm913 = vmor %vm911, %vm912
    %v914 = vsel %vm913, %v906, %v910
    %v915 = vand.u32 2147483647, %v510
    %vm916 = vcmp.eq.f32.partialorder %v915, 8.507059e+37
    %v917 = vand.u32 %v510, 2147483648
    %v918 = vor.u32 1.1754944e-38, %v917
    %v919 = vsel %vm916, %v918, %v914
    %v920 = vmul.f32 1.0, %v919
    %v921 = vrcp.pop %v511
    %v922 = vmul.f32 %v511, %v921
    %v923 = vsub.f32 1.0, %v922
    %v924 = vmul.f32 %v921, %v923
    %v925 = vadd.f32 %v921, %v924
    %vm926 = vweird.f32 %v511
    %vm927 = vweird.f32 %v921
    %vm928 = vmor %vm926, %vm927
    %v929 = vsel %vm928, %v921, %v925
    %v930 = vand.u32 2147483647, %v511
    %vm931 = vcmp.eq.f32.partialorder %v930, 8.507059e+37
    %v932 = vand.u32 %v511, 2147483648
    %v933 = vor.u32 1.1754944e-38, %v932
    %v934 = vsel %vm931, %v933, %v929
    %v935 = vmul.f32 1.0, %v934
    %v936 = vrcp.pop %v512
    %v937 = vmul.f32 %v512, %v936
    %v938 = vsub.f32 1.0, %v937
    %v939 = vmul.f32 %v936, %v938
    %v940 = vadd.f32 %v936, %v939
    %vm941 = vweird.f32 %v512
    %vm942 = vweird.f32 %v936
    %vm943 = vmor %vm941, %vm942
    %v944 = vsel %vm943, %v936, %v940
    %v945 = vand.u32 2147483647, %v512
    %vm946 = vcmp.eq.f32.partialorder %v945, 8.507059e+37
    %v947 = vand.u32 %v512, 2147483648
    %v948 = vor.u32 1.1754944e-38, %v947
    %v949 = vsel %vm946, %v948, %v944
    %v950 = vmul.f32 1.0, %v949
    %v951 = vrcp.pop %v513
    %v952 = vmul.f32 %v513, %v951
    %v953 = vsub.f32 1.0, %v952
    %v954 = vmul.f32 %v951, %v953
    %v955 = vadd.f32 %v951, %v954
    %vm956 = vweird.f32 %v513
    %vm957 = vweird.f32 %v951
    %vm958 = vmor %vm956, %vm957
    %v959 = vsel %vm958, %v951, %v955
    %v960 = vand.u32 2147483647, %v513
    %vm961 = vcmp.eq.f32.partialorder %v960, 8.507059e+37
    %v962 = vand.u32 %v513, 2147483648
    %v963 = vor.u32 1.1754944e-38, %v962
    %v964 = vsel %vm961, %v963, %v959
    %v965 = vmul.f32 1.0, %v964
    %v966 = vrcp.pop %v514
    %v967 = vmul.f32 %v514, %v966
    %v968 = vsub.f32 1.0, %v967
    %v969 = vmul.f32 %v966, %v968
    %v970 = vadd.f32 %v966, %v969
    %vm971 = vweird.f32 %v514
    %vm972 = vweird.f32 %v966
    %vm973 = vmor %vm971, %vm972
    %v974 = vsel %vm973, %v966, %v970
    %v975 = vand.u32 2147483647, %v514
    %vm976 = vcmp.eq.f32.partialorder %v975, 8.507059e+37
    %v977 = vand.u32 %v514, 2147483648
    %v978 = vor.u32 1.1754944e-38, %v977
    %v979 = vsel %vm976, %v978, %v974
    %v980 = vmul.f32 1.0, %v979
    %v981 = vrcp.pop %v515
    %v982 = vmul.f32 %v515, %v981
    %v983 = vsub.f32 1.0, %v982
    %v984 = vmul.f32 %v981, %v983
    %v985 = vadd.f32 %v981, %v984
    %vm986 = vweird.f32 %v515
    %vm987 = vweird.f32 %v981
    %vm988 = vmor %vm986, %vm987
    %v989 = vsel %vm988, %v981, %v985
    %v990 = vand.u32 2147483647, %v515
    %vm991 = vcmp.eq.f32.partialorder %v990, 8.507059e+37
    %v992 = vand.u32 %v515, 2147483648
    %v993 = vor.u32 1.1754944e-38, %v992
    %v994 = vsel %vm991, %v993, %v989
    %v995 = vmul.f32 1.0, %v994
    %v996 = vsub.f32 %v60, %v356
    %v997 = vsub.f32 %v61, %v357
    %v998 = vsub.f32 %v62, %v358
    %v999 = vsub.f32 %v63, %v359
    %v1000 = vsub.f32 %v64, %v360
    %v1001 = vsub.f32 %v65, %v361
    %v1002 = vsub.f32 %v66, %v362
    %v1003 = vsub.f32 %v67, %v363
    %v1004 = vsub.f32 %v68, %v364
    %v1005 = vsub.f32 %v69, %v365
    %v1006 = vsub.f32 %v70, %v366
    %v1007 = vsub.f32 %v71, %v367
    %v1008 = vsub.f32 %v72, %v368
    %v1009 = vsub.f32 %v73, %v369
    %v1010 = vsub.f32 %v74, %v370
    %v1011 = vsub.f32 %v75, %v371
    %v1012 = vsub.f32 %v76, %v372
    %v1013 = vsub.f32 %v77, %v373
    %v1014 = vsub.f32 %v78, %v374
    %v1015 = vsub.f32 %v79, %v375
    %v1016 = vsub.f32 %v80, %v376
    %v1017 = vsub.f32 %v81, %v377
    %v1018 = vsub.f32 %v82, %v378
    %v1019 = vsub.f32 %v83, %v379
    %v1020 = vsub.f32 %v84, %v380
    %v1021 = vsub.f32 %v85, %v381
    %v1022 = vsub.f32 %v86, %v382
    %v1023 = vsub.f32 %v87, %v383
    %v1024 = vsub.f32 %v88, %v384
    %v1025 = vsub.f32 %v89, %v385
    %v1026 = vsub.f32 %v90, %v386
    %v1027 = vsub.f32 %v91, %v387
    %v1028 = vmul.f32 %v530, %v996
    %v1029 = vmul.f32 %v545, %v997
    %v1030 = vmul.f32 %v560, %v998
    %v1031 = vmul.f32 %v575, %v999
    %v1032 = vmul.f32 %v590, %v1000
    %v1033 = vmul.f32 %v605, %v1001
    %v1034 = vmul.f32 %v620, %v1002
    %v1035 = vmul.f32 %v635, %v1003
    %v1036 = vmul.f32 %v650, %v1004
    %v1037 = vmul.f32 %v665, %v1005
    %v1038 = vmul.f32 %v680, %v1006
    %v1039 = vmul.f32 %v695, %v1007
    %v1040 = vmul.f32 %v710, %v1008
    %v1041 = vmul.f32 %v725, %v1009
    %v1042 = vmul.f32 %v740, %v1010
    %v1043 = vmul.f32 %v755, %v1011
    %v1044 = vmul.f32 %v770, %v1012
    %v1045 = vmul.f32 %v785, %v1013
    %v1046 = vmul.f32 %v800, %v1014
    %v1047 = vmul.f32 %v815, %v1015
    %v1048 = vmul.f32 %v830, %v1016
    %v1049 = vmul.f32 %v845, %v1017
    %v1050 = vmul.f32 %v860, %v1018
    %v1051 = vmul.f32 %v875, %v1019
    %v1052 = vmul.f32 %v890, %v1020
    %v1053 = vmul.f32 %v905, %v1021
    %v1054 = vmul.f32 %v920, %v1022
    %v1055 = vmul.f32 %v935, %v1023
    %v1056 = vmul.f32 %v950, %v1024
    %v1057 = vmul.f32 %v965, %v1025
    %v1058 = vmul.f32 %v980, %v1026
    %v1059 = vmul.f32 %v995, %v1027
    %v1060 = vadd.f32 %v356, %v1028
    %v1061 = vadd.f32 %v357, %v1029
    %v1062 = vadd.f32 %v358, %v1030
    %v1063 = vadd.f32 %v359, %v1031
    %v1064 = vadd.f32 %v360, %v1032
    %v1065 = vadd.f32 %v361, %v1033
    %v1066 = vadd.f32 %v362, %v1034
    %v1067 = vadd.f32 %v363, %v1035
    %v1068 = vadd.f32 %v364, %v1036
    %v1069 = vadd.f32 %v365, %v1037
    %v1070 = vadd.f32 %v366, %v1038
    %v1071 = vadd.f32 %v367, %v1039
    %v1072 = vadd.f32 %v368, %v1040
    %v1073 = vadd.f32 %v369, %v1041
    %v1074 = vadd.f32 %v370, %v1042
    %v1075 = vadd.f32 %v371, %v1043
    %v1076 = vadd.f32 %v372, %v1044
    %v1077 = vadd.f32 %v373, %v1045
    %v1078 = vadd.f32 %v374, %v1046
    %v1079 = vadd.f32 %v375, %v1047
    %v1080 = vadd.f32 %v376, %v1048
    %v1081 = vadd.f32 %v377, %v1049
    %v1082 = vadd.f32 %v378, %v1050
    %v1083 = vadd.f32 %v379, %v1051
    %v1084 = vadd.f32 %v380, %v1052
    %v1085 = vadd.f32 %v381, %v1053
    %v1086 = vadd.f32 %v382, %v1054
    %v1087 = vadd.f32 %v383, %v1055
    %v1088 = vadd.f32 %v384, %v1056
    %v1089 = vadd.f32 %v385, %v1057
    %v1090 = vadd.f32 %v386, %v1058
    %v1091 = vadd.f32 %v387, %v1059
    %1092 = vst [vmem:[#allocation8] sm:$0xff] %v1060
    %1093 = vst [vmem:[#allocation8 + $0x8] sm:$0xff] %v1061
    %1094 = vst [vmem:[#allocation8 + $0x10] sm:$0xff] %v1062
    %1095 = vst [vmem:[#allocation8 + $0x18] sm:$0xff] %v1063
    %1096 = vst [vmem:[#allocation8 + $0x20] sm:$0xff] %v1064
    %1097 = vst [vmem:[#allocation8 + $0x28] sm:$0xff] %v1065
    %1098 = vst [vmem:[#allocation8 + $0x30] sm:$0xff] %v1066
    %1099 = vst [vmem:[#allocation8 + $0x38] sm:$0xff] %v1067
    %1100 = vst [vmem:[#allocation8 + $0x40] sm:$0xff] %v1068
    %1101 = vst [vmem:[#allocation8 + $0x48] sm:$0xff] %v1069
    %1102 = vst [vmem:[#allocation8 + $0x50] sm:$0xff] %v1070
    %1103 = vst [vmem:[#allocation8 + $0x58] sm:$0xff] %v1071
    %1104 = vst [vmem:[#allocation8 + $0x60] sm:$0xff] %v1072
    %1105 = vst [vmem:[#allocation8 + $0x68] sm:$0xff] %v1073
    %1106 = vst [vmem:[#allocation8 + $0x70] sm:$0xff] %v1074
    %1107 = vst [vmem:[#allocation8 + $0x78] sm:$0xff] %v1075
    %1108 = vst [vmem:[#allocation8 + $0x80] sm:$0xff] %v1076
    %1109 = vst [vmem:[#allocation8 + $0x88] sm:$0xff] %v1077
    %1110 = vst [vmem:[#allocation8 + $0x90] sm:$0xff] %v1078
    %1111 = vst [vmem:[#allocation8 + $0x98] sm:$0xff] %v1079
    %1112 = vst [vmem:[#allocation8 + $0xa0] sm:$0xff] %v1080
    %1113 = vst [vmem:[#allocation8 + $0xa8] sm:$0xff] %v1081
    %1114 = vst [vmem:[#allocation8 + $0xb0] sm:$0xff] %v1082
    %1115 = vst [vmem:[#allocation8 + $0xb8] sm:$0xff] %v1083
    %1116 = vst [vmem:[#allocation8 + $0xc0] sm:$0xff] %v1084
    %1117 = vst [vmem:[#allocation8 + $0xc8] sm:$0xff] %v1085
    %1118 = vst [vmem:[#allocation8 + $0xd0] sm:$0xff] %v1086
    %1119 = vst [vmem:[#allocation8 + $0xd8] sm:$0xff] %v1087
    %1120 = vst [vmem:[#allocation8 + $0xe0] sm:$0xff] %v1088
    %1121 = vst [vmem:[#allocation8 + $0xe8] sm:$0xff] %v1089
    %1122 = vst [vmem:[#allocation8 + $0xf0] sm:$0xff] %v1090
    %1123 = vst [vmem:[#allocation8 + $0xf8] sm:$0xff] %v1091
    // Predicated region
    $region26: #{tpu_custom_call.1} parent=1 // pred_check
      _
    $region27: #{tpu_custom_call.1} parent=1 // pred_check_branch
      %1125 = sbr.rel (0) target = $region29
    $region28: #{tpu_custom_call.1} parent=1 // pred_region
      %1127 = vsyncadd [#allocation4], 2816
      %s1128 = sshll.u32 [#allocation8], 4
      %s1129 = int_to_ptr.vmem [resolvable:$true] %s1128
      %s1130 = sshll.u32 %s3, 4
      %s1131 = int_to_ptr.hbm [resolvable:$true] %s1130
      %1136 = dma.vmem_to_hbm [thread:$0]  %s1129, 1280, %s1131, [#allocation4], 128, 128, 8
    $region29: #{tpu_custom_call.1} parent=1 // pred_fallthru
      _
    // Predicated region
    $region30: #{tpu_custom_call.1} parent=1 // pred_check
      _
    $region31: #{tpu_custom_call.1} parent=1 // pred_check_branch
      %1138 = sbr.rel (0) target = $region33
    $region32: #{tpu_custom_call.1} parent=1 // pred_region
      %1140 = dma.done [#allocation4], 4096
    $region33: #{tpu_custom_call.1} parent=1 // pred_fallthru
      _
    %1141 = vsyncpa [#allocation3], 1
    %1142 = vsyncpa [#allocation6], 1
    %1143 = vsyncpa [#allocation4], 1

</llo_original>
